<compile_context>
chip_gen: v6e
topology: v6e:2x2x1
jax: 0.10.0
libtpu: 0.0.40
codegen_flags: <defaults>
</compile_context>

<pallas_src>
import functools

import jax
import jax.numpy as jnp
from jax.experimental import pallas as pl
from jax.experimental.pallas import tpu as pltpu


def _round_up(x, m):
    return ((x + m - 1) // m) * m


def _num_tensorcores():
    # Best-effort TensorCore count (v7x has 2 per chip).  Only used to decide
    # how many batch tiles the "parallel" grid axis needs for megacore sharding.
    try:
        info = pltpu.get_tpu_info()
        for attr in ("num_cores", "core_count", "num_tensorcores"):
            v = getattr(info, attr, None)
            if v:
                return int(v)
    except Exception:
        pass
    return 1


def _vmem_limit_bytes():
    # Generation-aware VMEM budget: ~48 MiB on v7x (64 MiB physical),
    # ~96 MiB on v5e/v6e (128 MiB physical).  Conservative fallback otherwise.
    try:
        cap = int(pltpu.get_tpu_info().vmem_capacity_bytes)
    except Exception:
        cap = 64 * 1024 * 1024
    return int(min(cap - 16 * 1024 * 1024, 96 * 1024 * 1024))


def _pick_batch_tile(B, max_tile, min_tiles=1):
    # BB must divide B and (because it appears as the sublane dim of 3-D blocks)
    # must be a multiple of 8 unless it spans the whole batch.
    if B <= 8 or B % 8 != 0:
        return B
    cands = [t for t in range(8, B + 1, 8) if B % t == 0 and t <= max_tile]
    if not cands:
        cands = [8]
    for t in sorted(cands, reverse=True):
        if B // t >= min_tiles:
            return t
    return cands[0]            # smallest candidate -> most tiles


# ----------------------------------------------------------------------------
# Kernel 1: Conv1d('same') + ReLU + MaxPool1d + LSTM input projection, fused.
# One batch tile per grid step; input is a lane-dense, TIME-MAJOR im2col slab,
# so the kernel is just two deep matmuls and leading-dim reshapes.
# ----------------------------------------------------------------------------
def _conv_pool_proj_kernel(xcol_ref, wc_ref, bc_ref, wih_ref, bl_ref, gx_ref,
                           *, S, P, S_out):
    # xcol_ref: (S, BB, KEp)     time-major, lane-dense im2col slab
    # wc_ref  : (KEp, Fp)        im2col-flattened conv weight (zero-padded)
    # bc_ref  : (1, Fp)          conv bias (f32)
    # wih_ref : (Fp, Gp)         LSTM input projection, packed gates i|f|g|o
    # bl_ref  : (1, Gp)          b_ih + b_hh, packed gates (f32)
    # gx_ref  : (S_out, BB, Gp)  precomputed LSTM input gates, time-major (f32)
    BB = xcol_ref.shape[1]
    KEp = xcol_ref.shape[2]
    Fp = wc_ref.shape[1]
    Gp = wih_ref.shape[1]

    xcol = xcol_ref[...].reshape(S * BB, KEp)          # leading-dim merge only
    acc = jnp.dot(xcol, wc_ref[...], preferred_element_type=jnp.float32)
    acc = jnp.maximum(acc + bc_ref[...], 0.0)          # conv bias + ReLU (f32)

    # MaxPool1d(kernel=P, stride=P), floor mode.  Rows are time-major, so the
    # pool groups are a leading-dim split; the max is an unrolled elementwise
    # maximum over P static slices (no cross-lane relayout).
    if S != S_out * P:
        acc = acc.reshape(S, BB, Fp)[:S_out * P]
        acc = acc.reshape(S_out, P, BB, Fp)
    else:
        acc = acc.reshape(S_out, P, BB, Fp)
    pooled = acc[:, 0]
    for p_i in range(1, P):
        pooled = jnp.maximum(pooled, acc[:, p_i])
    pooled = pooled.reshape(S_out * BB, Fp)

    # Fused, time-invariant LSTM input projection (hoisted out of the
    # recurrence): gx = pooled @ W_ih^T + (b_ih + b_hh), packed gate order.
    gx = jnp.dot(pooled.astype(wih_ref.dtype), wih_ref[...],
                 preferred_element_type=jnp.float32)
    gx_ref[...] = (gx + bl_ref[...]).reshape(S_out, BB, Gp)


def conv_relu_pool_proj(x_bse, wc, bc, wih, bl, *, K, P, compute_dtype):
    B, S, E = x_bse.shape
    KEp, Fp = wc.shape
    Gp = wih.shape[1]
    S_out = S // P
    pad_l = (K - 1) // 2
    pad_r = (K - 1) - pad_l

    # 'same' padding + im2col slab + time-major layout built ONCE in the
    # wrapper (one XLA fusion).  Last dim is lane-dense (KEp % 128 == 0) so the
    # kernel sees only leading-dim reshapes and full 128-lane MXU operands.
    xp = jnp.pad(x_bse, ((0, 0), (pad_l, pad_r), (0, 0)))
    xcol = jnp.concatenate([xp[:, k:k + S, :] for k in range(K)], axis=-1)
    xcol = jnp.pad(xcol, ((0, 0), (0, 0), (0, KEp - K * E)))
    xcol = jnp.transpose(xcol, (1, 0, 2)).astype(compute_dtype)   # (S, B, KEp)

    ncores = _num_tensorcores()
    min_tiles = 2 * ncores if (ncores > 1 and B >= 16) else 1
    BB = _pick_batch_tile(B, max_tile=32, min_tiles=min_tiles)
    n_tiles = B // BB
    kernel = functools.partial(_conv_pool_proj_kernel, S=S, P=P, S_out=S_out)
    return pl.pallas_call(
        kernel,
        out_shape=jax.ShapeDtypeStruct((S_out, B, Gp), jnp.float32),
        grid=(n_tiles,),
        in_specs=[
            pl.BlockSpec((S, BB, KEp), lambda b: (0, b, 0)),
            pl.BlockSpec((KEp, Fp), lambda b: (0, 0)),
            pl.BlockSpec((1, Fp), lambda b: (0, 0)),
            pl.BlockSpec((Fp, Gp), lambda b: (0, 0)),
            pl.BlockSpec((1, Gp), lambda b: (0, 0)),
        ],
        out_specs=pl.BlockSpec((S_out, BB, Gp), lambda b: (0, b, 0)),
        compiler_params=pltpu.CompilerParams(
            dimension_semantics=("parallel",),        # batch tiles -> both TCs
            vmem_limit_bytes=_vmem_limit_bytes()),
    )(xcol, wc.astype(compute_dtype), bc, wih.astype(compute_dtype), bl)


# ----------------------------------------------------------------------------
# Kernel 2: single-layer unidirectional LSTM.  The whole time recurrence runs
# inside one grid step (fori_loop); grid only over batch tiles ("parallel").
# Gates are packed (PyTorch order i|f|g|o) into a single Gp = round_up(4H,128)
# lane axis, so the serial path does one (BB,H)x(H,Gp) matmul, one sigmoid and
# one tanh pass per step.
# ----------------------------------------------------------------------------
def _lstm_kernel(gx_ref, whh_ref, h_out_ref, *, H, T):
    # gx_ref   : (T, BB, Gp)  time-major, precomputed x-projection incl. biases
    # whh_ref  : (H, Gp)      recurrent weights, packed gate order
    # h_out_ref: (BB, H)      final hidden state (== hidden[-1])
    #
    # Padding invariant: lanes [4H:Gp) of gx / whh / biases are zero and
    # h0 = c0 = 0, so padded gate lanes stay zero and never touch real lanes.
    BB = gx_ref.shape[1]
    Gp = gx_ref.shape[2]
    whh = whh_ref[...]

    # Static lane mask: tanh for the 'g' gate lanes, sigmoid for i/f/o.  One
    # full-width sigmoid + one full-width tanh per step (2 EUP passes, not 4).
    lane = jax.lax.broadcasted_iota(jnp.int32, (BB, Gp), 1)
    tanh_lane = (lane >= 2 * H) & (lane < 3 * H)

    def step(t, carry):
        h, c = carry
        gates = gx_ref[t] + jnp.dot(h.astype(whh.dtype), whh,
                                    preferred_element_type=jnp.float32)
        act = jnp.where(tanh_lane, jnp.tanh(gates), jax.nn.sigmoid(gates))
        i_g = act[:, 0 * H:1 * H]                    # static lane slices
        f_g = act[:, 1 * H:2 * H]
        g_g = act[:, 2 * H:3 * H]
        o_g = act[:, 3 * H:4 * H]
        c_new = f_g * c + i_g * g_g                  # element-wise math in f32
        h_new = o_g * jnp.tanh(c_new)
        return h_new, c_new

    h0 = jnp.zeros((BB, H), jnp.float32)
    c0 = jnp.zeros((BB, H), jnp.float32)
    # Partial unroll: the next step's recurrent-matmul push can overlap the
    # EUP/VPU tail of the current step without blowing up code size.
    h, _ = jax.lax.fori_loop(0, T, step, (h0, c0),
                             unroll=T if T <= 16 else 8)
    h_out_ref[...] = h


def lstm_last_hidden(gx_tbg, whh, *, H, compute_dtype):
    T, B, Gp = gx_tbg.shape
    ncores = _num_tensorcores()
    # v7x: at least one tile per TensorCore so the "parallel" axis shards; on
    # single-TC chips prefer the largest tile (fewest total serial LSTM steps).
    min_tiles = ncores if (ncores > 1 and B >= 16) else 1
    # Keep each double-buffered gx block around <= 16 MiB.
    max_tile = max(8, (16 * 1024 * 1024) // max(1, T * Gp * 4))
    BB = _pick_batch_tile(B, max_tile=max_tile, min_tiles=min_tiles)
    n_tiles = B // BB
    # TODO(synk): for very long T, chunk the time axis with an inner
    # emit_pipeline instead of keeping the whole (T, BB, Gp) block resident.
    kernel = functools.partial(_lstm_kernel, H=H, T=T)
    return pl.pallas_call(
        kernel,
        out_shape=jax.ShapeDtypeStruct((B, H), jnp.float32),
        grid=(n_tiles,),
        in_specs=[
            pl.BlockSpec((T, BB, Gp), lambda b: (0, b, 0)),
            pl.BlockSpec((H, Gp), lambda b: (0, 0)),
        ],
        out_specs=pl.BlockSpec((BB, H), lambda b: (b, 0)),
        compiler_params=pltpu.CompilerParams(
            dimension_semantics=("parallel",),        # batch tiles -> both TCs
            vmem_limit_bytes=_vmem_limit_bytes()),
    )(gx_tbg, whh.astype(compute_dtype))


# ----------------------------------------------------------------------------
# Full forward (embedding gather + tiny glue in XLA, hot path in Pallas).
# ----------------------------------------------------------------------------
def sentiment_conv_lstm_forward(params, input_ids, sorted_lengths=None, *,
                                compute_dtype=jnp.float32):
    # sorted_lengths is accepted for signature parity; the PyTorch forward never
    # uses it (no pack_padded_sequence call).  Dropout in eval mode == identity.
    del sorted_lengths
    p = params
    # TODO(synk): fuse the embedding gather into kernel 1 via scalar-prefetch
    # row gather (PrefetchScalarGridSpec); kept as an XLA gather here.
    x = jnp.take(p["embedding"], input_ids, axis=0)            # (B, S, E)
    gx = conv_relu_pool_proj(x, p["conv_w_flat"], p["conv_b_p"],
                             p["w_ih_t_p"], p["b_lstm_p"],
                             K=p["K"], P=p["pool"], compute_dtype=compute_dtype)
    h = lstm_last_hidden(gx, p["w_hh_t_p"], H=p["H"],
                         compute_dtype=compute_dtype)           # (B, H)
    return {"pooler_output": h}


# ----------------------------------------------------------------------------
# Parameter handling: raw params use PyTorch layouts; prepare_params converts
# them to the padded, packed-gate kernel layouts (and applies b = b_ih + b_hh).
# ----------------------------------------------------------------------------
def init_raw_params(key, vocab, E, F, K, H):
    ks = jax.random.split(key, 7)
    emb = jax.random.normal(ks[0], (vocab, E), jnp.float32) * 0.1
    conv_w = jax.random.normal(ks[1], (F, E, K), jnp.float32) / jnp.sqrt(E * K)
    conv_b = jax.random.normal(ks[2], (F,), jnp.float32) * 0.01
    w_ih = jax.random.normal(ks[3], (4 * H, F), jnp.float32) / jnp.sqrt(H)
    w_hh = jax.random.normal(ks[4], (4 * H, H), jnp.float32) / jnp.sqrt(H)
    b_ih = jax.random.normal(ks[5], (4 * H,), jnp.float32) * 0.01
    b_hh = jax.random.normal(ks[6], (4 * H,), jnp.float32) * 0.01
    return dict(embedding=emb, conv_w=conv_w, conv_b=conv_b,
                w_ih=w_ih, w_hh=w_hh, b_ih=b_ih, b_hh=b_hh)


def prepare_params(raw, pool):
    emb = raw["embedding"].at[0].set(0.0)          # padding_idx=0
    conv_w = raw["conv_w"]                          # (F, E, K) PyTorch layout
    F, E, K = conv_w.shape
    H = raw["w_hh"].shape[1]
    Fp = _round_up(F, 128)                          # lane-dense conv/pooled width
    Gp = _round_up(4 * H, 128)                      # packed gates, padded whole
    KEp = _round_up(K * E, 128)                     # lane-dense im2col depth

    # Conv weight -> im2col-flattened (KEp, Fp):  wc[k*E+e, f] = w[f, e, k].
    wc = jnp.transpose(conv_w, (2, 1, 0)).reshape(K * E, F)
    wc = jnp.pad(wc, ((0, KEp - K * E), (0, Fp - F)))
    bc = jnp.pad(raw["conv_b"], (0, Fp - F)).reshape(1, Fp)

    # LSTM weights: transposed, PyTorch gate order i|f|g|o kept CONTIGUOUS; the
    # 4H axis is padded as a whole (no per-gate 128-lane slabs).
    w_ih_t = jnp.pad(raw["w_ih"].T, ((0, Fp - F), (0, Gp - 4 * H)))   # (Fp, Gp)
    w_hh_t = jnp.pad(raw["w_hh"].T, ((0, 0), (0, Gp - 4 * H)))        # (H, Gp)
    b = (raw["b_ih"] + raw["b_hh"]).reshape(1, 4 * H)
    b_p = jnp.pad(b, ((0, 0), (0, Gp - 4 * H)))                       # (1, Gp)

    return dict(embedding=emb, conv_w_flat=wc, conv_b_p=bc,
                w_ih_t_p=w_ih_t, w_hh_t_p=w_hh_t, b_lstm_p=b_p,
                K=K, pool=pool, H=H)


# ----------------------------------------------------------------------------
# Pure-JAX reference (f32, PyTorch-layout weights) for a correctness check.
# ----------------------------------------------------------------------------
def reference_forward(raw, input_ids, pool):
    emb = raw["embedding"].at[0].set(0.0)
    x = emb[input_ids]                               # (B, S, E)
    conv_w = raw["conv_w"]                           # (F, E, K)
    F, E, K = conv_w.shape
    B, S, _ = x.shape
    pad_l = (K - 1) // 2
    pad_r = (K - 1) - pad_l
    xp = jnp.pad(x, ((0, 0), (pad_l, pad_r), (0, 0)))
    acc = jnp.broadcast_to(raw["conv_b"][None, None, :], (B, S, F)).astype(jnp.float32)
    for k in range(K):
        acc = acc + jnp.einsum("bse,fe->bsf", xp[:, k:k + S], conv_w[:, :, k],
                               precision=jax.lax.Precision.HIGHEST)
    acc = jnp.maximum(acc, 0.0)
    S_out = S // pool
    y = jnp.max(acc[:, :S_out * pool].reshape(B, S_out, pool, F), axis=2)

    H = raw["w_hh"].shape[1]
    w_ih_t, w_hh_t = raw["w_ih"].T, raw["w_hh"].T
    b = raw["b_ih"] + raw["b_hh"]

    def step(carry, xt):
        h, c = carry
        gates = (jnp.dot(xt, w_ih_t, precision=jax.lax.Precision.HIGHEST)
                 + jnp.dot(h, w_hh_t, precision=jax.lax.Precision.HIGHEST) + b)
        i = jax.nn.sigmoid(gates[:, :H])
        f = jax.nn.sigmoid(gates[:, H:2 * H])
        g = jnp.tanh(gates[:, 2 * H:3 * H])
        o = jax.nn.sigmoid(gates[:, 3 * H:])
        c = f * c + i * g
        h = o * jnp.tanh(c)
        return (h, c), None

    (h, _), _ = jax.lax.scan(step, (jnp.zeros((B, H), jnp.float32),
                                    jnp.zeros((B, H), jnp.float32)),
                             jnp.transpose(y, (1, 0, 2)))
    return h


if __name__ == "__main__":
    # Small cfg: input_size(vocab)=50, embedding_dim=16, conv1d_filters=32,
    # conv1d_kernel_size=3, max_pool_kernel_size=2, hidden_size=32,
    # num_layers=1, bidirectional=False, dropout -> eval identity.
    B, S, VOCAB, E, F, K, P, H = 2, 16, 50, 16, 32, 3, 2, 32

    key = jax.random.PRNGKey(0)
    k_ids, k_par = jax.random.split(key)
    input_ids = jax.random.randint(k_ids, (B, S), 0, VOCAB, dtype=jnp.int32)
    sorted_lengths = jnp.full((B,), S, dtype=jnp.int32)   # unused by forward
    raw = init_raw_params(k_par, VOCAB, E, F, K, H)
    params = prepare_params(raw, P)

    # f32 path (matches the PyTorch module numerically).
    out = sentiment_conv_lstm_forward(params, input_ids, sorted_lengths,
                                      compute_dtype=jnp.float32)
    pooled = jax.block_until_ready(out["pooler_output"])
    assert pooled.shape == (B, H)

    ref = jax.block_until_ready(reference_forward(raw, input_ids, P))
    assert jnp.allclose(pooled, ref, atol=2e-2, rtol=2e-2), (
        f"mismatch: max abs diff {jnp.max(jnp.abs(pooled - ref))}")

    # bf16-MXU path (v6e/v7x): bf16 matmul inputs, f32 accumulation, f32 gates.
    out_bf16 = sentiment_conv_lstm_forward(params, input_ids, sorted_lengths,
                                           compute_dtype=jnp.bfloat16)
    pooled_bf16 = jax.block_until_ready(out_bf16["pooler_output"])
    assert pooled_bf16.shape == (B, H)
    assert jnp.allclose(pooled_bf16, ref, atol=1e-1, rtol=1e-1)

    print("KERNEL_OK")
</pallas_src>

<mosaic_0001>
module attributes {stable_mosaic.version = 11 : i64} {
  func.func @_conv_pool_proj_kernel(%arg0: i32, %arg1: memref<16x2x128xf32, #tpu.memory_space<vmem>>, %arg2: memref<128x128xf32, #tpu.memory_space<vmem>>, %arg3: memref<1x128xf32, #tpu.memory_space<vmem>>, %arg4: memref<128x128xf32, #tpu.memory_space<vmem>>, %arg5: memref<1x128xf32, #tpu.memory_space<vmem>>, %arg6: memref<8x2x128xf32, #tpu.memory_space<vmem>>) attributes {dimension_semantics = [#tpu.dimension_semantics<parallel>], iteration_bounds = array<i64: 1>, scalar_prefetch = 0 : i64, scratch_operands = 0 : i64, tpu.core_type = #tpu.core_type<tc>, window_params = [{transform_indices = @transform_0, window_bounds = array<i64: 16, 2, 128>}, {pipeline_mode = #tpu.pipeline_mode<synchronous>, transform_indices = @transform_1, window_bounds = array<i64: 128, 128>}, {pipeline_mode = #tpu.pipeline_mode<synchronous>, transform_indices = @transform_2, window_bounds = array<i64: 1, 128>}, {pipeline_mode = #tpu.pipeline_mode<synchronous>, transform_indices = @transform_3, window_bounds = array<i64: 128, 128>}, {pipeline_mode = #tpu.pipeline_mode<synchronous>, transform_indices = @transform_4, window_bounds = array<i64: 1, 128>}, {transform_indices = @transform_5, window_bounds = array<i64: 8, 2, 128>}]} {
    %c0 = arith.constant 0 : index
    %c0_0 = arith.constant 0 : index
    %c0_1 = arith.constant 0 : index
    %0 = vector.load %arg1[%c0, %c0_0, %c0_1] : memref<16x2x128xf32, #tpu.memory_space<vmem>>, vector<16x2x128xf32>
    %1 = vector.shape_cast %0 : vector<16x2x128xf32> to vector<32x128xf32>
    %c0_2 = arith.constant 0 : index
    %c0_3 = arith.constant 0 : index
    %2 = vector.load %arg2[%c0_2, %c0_3] : memref<128x128xf32, #tpu.memory_space<vmem>>, vector<128x128xf32>
    %cst = arith.constant dense<0.000000e+00> : vector<32x128xf32>
    %3 = tpu.matmul %1, %2, %cst {dimension_numbers = #tpu.dot_dimension_numbers<[1], [0], [0], [1], [0, 0, 1, 1], [], []>} : vector<32x128xf32>, vector<128x128xf32>, vector<32x128xf32> -> vector<32x128xf32>
    %c0_4 = arith.constant 0 : index
    %c0_5 = arith.constant 0 : index
    %4 = vector.load %arg3[%c0_4, %c0_5] : memref<1x128xf32, #tpu.memory_space<vmem>>, vector<1x128xf32>
    %5 = vector.broadcast %4 : vector<1x128xf32> to vector<32x128xf32>
    %6 = arith.addf %3, %5 : vector<32x128xf32>
    %cst_6 = arith.constant 0.000000e+00 : f32
    %7 = vector.broadcast %cst_6 : f32 to vector<32x128xf32>
    %8 = arith.maximumf %6, %7 : vector<32x128xf32>
    %9 = vector.shape_cast %8 : vector<32x128xf32> to vector<8x2x2x128xf32>
    %10 = vector.extract_strided_slice %9 {offsets = [0, 0, 0, 0], sizes = [8, 1, 2, 128], strides = [1, 1, 1, 1]} : vector<8x2x2x128xf32> to vector<8x1x2x128xf32>
    %11 = vector.shape_cast %10 : vector<8x1x2x128xf32> to vector<8x2x128xf32>
    %12 = vector.extract_strided_slice %9 {offsets = [0, 1, 0, 0], sizes = [8, 1, 2, 128], strides = [1, 1, 1, 1]} : vector<8x2x2x128xf32> to vector<8x1x2x128xf32>
    %13 = vector.shape_cast %12 : vector<8x1x2x128xf32> to vector<8x2x128xf32>
    %14 = arith.maximumf %11, %13 : vector<8x2x128xf32>
    %15 = vector.shape_cast %14 : vector<8x2x128xf32> to vector<16x128xf32>
    %c0_7 = arith.constant 0 : index
    %c0_8 = arith.constant 0 : index
    %16 = vector.load %arg4[%c0_7, %c0_8] : memref<128x128xf32, #tpu.memory_space<vmem>>, vector<128x128xf32>
    %cst_9 = arith.constant dense<0.000000e+00> : vector<16x128xf32>
    %17 = tpu.matmul %15, %16, %cst_9 {dimension_numbers = #tpu.dot_dimension_numbers<[1], [0], [0], [1], [0, 0, 1, 1], [], []>} : vector<16x128xf32>, vector<128x128xf32>, vector<16x128xf32> -> vector<16x128xf32>
    %c0_10 = arith.constant 0 : index
    %c0_11 = arith.constant 0 : index
    %18 = vector.load %arg5[%c0_10, %c0_11] : memref<1x128xf32, #tpu.memory_space<vmem>>, vector<1x128xf32>
    %19 = vector.broadcast %18 : vector<1x128xf32> to vector<16x128xf32>
    %20 = arith.addf %17, %19 : vector<16x128xf32>
    %21 = vector.shape_cast %20 : vector<16x128xf32> to vector<8x2x128xf32>
    %c0_12 = arith.constant 0 : index
    %c0_13 = arith.constant 0 : index
    %c0_14 = arith.constant 0 : index
    %22 = vector.load %arg6[%c0_12, %c0_13, %c0_14] : memref<8x2x128xf32, #tpu.memory_space<vmem>>, vector<8x2x128xf32>
    tpu.vector_store %arg6[%c0_12, %c0_13, %c0_14], %21 {strides = array<i32>} : memref<8x2x128xf32, #tpu.memory_space<vmem>>, vector<8x2x128xf32>,
    return
  }
  func.func @transform_0(%arg0: i32) -> (i32, i32, i32) {
    %c0_i32 = arith.constant 0 : i32
    %c0_i32_0 = arith.constant 0 : i32
    %c0_i32_1 = arith.constant 0 : i32
    return %c0_i32, %arg0, %c0_i32_0 : i32, i32, i32
  }
  func.func @transform_1(%arg0: i32) -> (i32, i32) {
    %c0_i32 = arith.constant 0 : i32
    %c0_i32_0 = arith.constant 0 : i32
    %c0_i32_1 = arith.constant 0 : i32
    return %c0_i32, %c0_i32_0 : i32, i32
  }
  func.func @transform_2(%arg0: i32) -> (i32, i32) {
    %c0_i32 = arith.constant 0 : i32
    %c0_i32_0 = arith.constant 0 : i32
    %c0_i32_1 = arith.constant 0 : i32
    return %c0_i32, %c0_i32_0 : i32, i32
  }
  func.func @transform_3(%arg0: i32) -> (i32, i32) {
    %c0_i32 = arith.constant 0 : i32
    %c0_i32_0 = arith.constant 0 : i32
    %c0_i32_1 = arith.constant 0 : i32
    return %c0_i32, %c0_i32_0 : i32, i32
  }
  func.func @transform_4(%arg0: i32) -> (i32, i32) {
    %c0_i32 = arith.constant 0 : i32
    %c0_i32_0 = arith.constant 0 : i32
    %c0_i32_1 = arith.constant 0 : i32
    return %c0_i32, %c0_i32_0 : i32, i32
  }
  func.func @transform_5(%arg0: i32) -> (i32, i32, i32) {
    %c0_i32 = arith.constant 0 : i32
    %c0_i32_0 = arith.constant 0 : i32
    %c0_i32_1 = arith.constant 0 : i32
    return %c0_i32, %arg0, %c0_i32_0 : i32, i32, i32
  }
}

</mosaic_0001>

<llo_original>
// kernel: tpu_custom_call.1
$region0: #{tpu_custom_call.1}
  #allocation0 [shape = 'u32[]', space=smem, size = 0x4, offset = 0x4, fixed_abs, tag = 'smem constant byte address 0x4 - core index']
  #allocation1 [shape = 'u32[144,128]{1,0:T(1,128)}', space=vmem, size = 0x12000, scoped, tag = 'internal scratch']
  %s0 = inlined_call_operand.hbm [shape: f32[16,2,128], index: 0, kind: input, shape index: {}]
  %s1 = inlined_call_operand.hbm [shape: f32[128,128], index: 1, kind: input, shape index: {}]
  %s2 = inlined_call_operand.vmem [shape: f32[1,128], index: 2, kind: input, shape index: {}]
  %s3 = inlined_call_operand.hbm [shape: f32[128,128], index: 3, kind: input, shape index: {}]
  %s4 = inlined_call_operand.vmem [shape: f32[1,128], index: 4, kind: input, shape index: {}]
  %s5 = inlined_call_operand.hbm [shape: f32[8,2,128], index: 5, kind: output, shape index: {}]
  %s6 = sld [smem:[#allocation0]]
  $region42: #{tpu_custom_call.1} parent=0
    _
  %s8 = ssub.s32 1, %s6
  %s9 = scalar_select 0, %s8, %s6
  $region1: #{tpu_custom_call.1} parent=0
    #allocation2 [shape = 'u8[16384]{0}', space=vmem, size = 0x4000, scoped, tag = 'input window, operand 0, single buffered']
    #allocation3 [shape = 's32[1]{0}', space=sflag, size = 0x4, scoped, tag = 'scoped memory for tpu_custom_call.1']
    #allocation4 [shape = 's32[1]{0}', space=sflag, size = 0x4, scoped, tag = 'scoped memory for tpu_custom_call.1']
    #allocation5 [shape = 'u8[65536]{0}', space=vmem, size = 0x10000, scoped, tag = 'input window, operand 1, single buffered']
    #allocation6 [shape = 's32[1]{0}', space=sflag, size = 0x4, scoped, tag = 'scoped memory for tpu_custom_call.1']
    #allocation7 [shape = 'u8[65536]{0}', space=vmem, size = 0x10000, scoped, tag = 'input window, operand 3, single buffered']
    #allocation8 [shape = 'u8[8192]{0}', space=vmem, size = 0x2000, scoped, tag = 'output window, operand 0, single buffered']
    %10 = vsyncpa [#allocation3], 0
    %11 = vsyncpa [#allocation6], 0
    %12 = vsyncpa [#allocation4], 0
    // Predicated region
    $region2: #{tpu_custom_call.1} parent=1 // pred_check
      _
    $region3: #{tpu_custom_call.1} parent=1 // pred_check_branch
      %14 = sbr.rel (0) target = $region5
    $region4: #{tpu_custom_call.1} parent=1 // pred_region
      %s16 = ssub.s32 512, 512
      %17 = vsyncadd [#allocation3], %s16
      %s18 = sshll.u32 [#allocation2], 4
      %s19 = int_to_ptr.vmem [resolvable:$true] %s18
      %24 = dma.hbm_to_vmem [thread:$0]  %s0, 512, %s19, [#allocation3], 32, 32, 2
    $region5: #{tpu_custom_call.1} parent=1 // pred_fallthru
      _
    // Predicated region
    $region6: #{tpu_custom_call.1} parent=1 // pred_check
      _
    $region7: #{tpu_custom_call.1} parent=1 // pred_check_branch
      %26 = sbr.rel (0) target = $region9
    $region8: #{tpu_custom_call.1} parent=1 // pred_region
      %s28 = ssub.s32 2048, 2048
      %29 = vsyncadd [#allocation6], %s28
      %s30 = sshll.u32 [#allocation5], 4
      %s31 = int_to_ptr.vmem [resolvable:$true] %s30
      %36 = dma.hbm_to_vmem [thread:$0]  %s1, 2048, %s31, [#allocation6], 128, 128, 8
    $region9: #{tpu_custom_call.1} parent=1 // pred_fallthru
      _
    // Predicated region
    $region10: #{tpu_custom_call.1} parent=1 // pred_check
      _
    $region11: #{tpu_custom_call.1} parent=1 // pred_check_branch
      %38 = sbr.rel (0) target = $region13
    $region12: #{tpu_custom_call.1} parent=1 // pred_region
      _
    $region13: #{tpu_custom_call.1} parent=1 // pred_fallthru
      _
    // Predicated region
    $region14: #{tpu_custom_call.1} parent=1 // pred_check
      _
    $region15: #{tpu_custom_call.1} parent=1 // pred_check_branch
      %40 = sbr.rel (0) target = $region17
    $region16: #{tpu_custom_call.1} parent=1 // pred_region
      %s42 = ssub.s32 2048, 2048
      %43 = vsyncadd [#allocation6], %s42
      %s44 = sshll.u32 [#allocation7], 4
      %s45 = int_to_ptr.vmem [resolvable:$true] %s44
      %50 = dma.hbm_to_vmem [thread:$0]  %s3, 2048, %s45, [#allocation6], 128, 128, 8
    $region17: #{tpu_custom_call.1} parent=1 // pred_fallthru
      _
    // Predicated region
    $region18: #{tpu_custom_call.1} parent=1 // pred_check
      _
    $region19: #{tpu_custom_call.1} parent=1 // pred_check_branch
      %52 = sbr.rel (0) target = $region21
    $region20: #{tpu_custom_call.1} parent=1 // pred_region
      _
    $region21: #{tpu_custom_call.1} parent=1 // pred_fallthru
      _
    // Predicated region
    $region22: #{tpu_custom_call.1} parent=1 // pred_check
      _
    $region23: #{tpu_custom_call.1} parent=1 // pred_check_branch
      %54 = sbr.rel (0) target = $region25
    $region24: #{tpu_custom_call.1} parent=1 // pred_region
      %55 = dma.done [#allocation3], 512
    $region25: #{tpu_custom_call.1} parent=1 // pred_fallthru
      _
    // Predicated region
    $region26: #{tpu_custom_call.1} parent=1 // pred_check
      _
    $region27: #{tpu_custom_call.1} parent=1 // pred_check_branch
      %57 = sbr.rel (0) target = $region29
    $region28: #{tpu_custom_call.1} parent=1 // pred_region
      %58 = dma.done [#allocation6], 2048
    $region29: #{tpu_custom_call.1} parent=1 // pred_fallthru
      _
    // Predicated region
    $region30: #{tpu_custom_call.1} parent=1 // pred_check
      _
    $region31: #{tpu_custom_call.1} parent=1 // pred_check_branch
      %60 = sbr.rel (0) target = $region33
    $region32: #{tpu_custom_call.1} parent=1 // pred_region
      %61 = dma.done [#allocation6], 2048
    $region33: #{tpu_custom_call.1} parent=1 // pred_fallthru
      _
    %v62 = vld [vmem:[#allocation2] sm:$0x3]
    %v63 = vld [vmem:[#allocation2 + $0x2] sm:$0x3]
    %v64 = vld [vmem:[#allocation2 + $0x4] sm:$0x3]
    %v65 = vld [vmem:[#allocation2 + $0x6] sm:$0x3]
    %v66 = vld [vmem:[#allocation2 + $0x8] sm:$0x3]
    %v67 = vld [vmem:[#allocation2 + $0xa] sm:$0x3]
    %v68 = vld [vmem:[#allocation2 + $0xc] sm:$0x3]
    %v69 = vld [vmem:[#allocation2 + $0xe] sm:$0x3]
    %v70 = vld [vmem:[#allocation2 + $0x10] sm:$0x3]
    %v71 = vld [vmem:[#allocation2 + $0x12] sm:$0x3]
    %v72 = vld [vmem:[#allocation2 + $0x14] sm:$0x3]
    %v73 = vld [vmem:[#allocation2 + $0x16] sm:$0x3]
    %v74 = vld [vmem:[#allocation2 + $0x18] sm:$0x3]
    %v75 = vld [vmem:[#allocation2 + $0x1a] sm:$0x3]
    %v76 = vld [vmem:[#allocation2 + $0x1c] sm:$0x3]
    %v77 = vld [vmem:[#allocation2 + $0x1e] sm:$0x3]
    %v78 = vld [vmem:[#allocation5] sm:$0xff]
    %v79 = vld [vmem:[#allocation5 + $0x8] sm:$0xff]
    %v80 = vld [vmem:[#allocation5 + $0x10] sm:$0xff]
    %v81 = vld [vmem:[#allocation5 + $0x18] sm:$0xff]
    %v82 = vld [vmem:[#allocation5 + $0x20] sm:$0xff]
    %v83 = vld [vmem:[#allocation5 + $0x28] sm:$0xff]
    %v84 = vld [vmem:[#allocation5 + $0x30] sm:$0xff]
    %v85 = vld [vmem:[#allocation5 + $0x38] sm:$0xff]
    %v86 = vld [vmem:[#allocation5 + $0x40] sm:$0xff]
    %v87 = vld [vmem:[#allocation5 + $0x48] sm:$0xff]
    %v88 = vld [vmem:[#allocation5 + $0x50] sm:$0xff]
    %v89 = vld [vmem:[#allocation5 + $0x58] sm:$0xff]
    %v90 = vld [vmem:[#allocation5 + $0x60] sm:$0xff]
    %v91 = vld [vmem:[#allocation5 + $0x68] sm:$0xff]
    %v92 = vld [vmem:[#allocation5 + $0x70] sm:$0xff]
    %v93 = vld [vmem:[#allocation5 + $0x78] sm:$0xff]
    %v94 = vld [vmem:[%s2] sm:$0x1]
    %v96 = vlaneseq
    %v97 = vshrl.u32 %v96, 7
    %v98 = vsub.s32 0, %v97
    %v99 = vrot.slane %v94, %v98
    %v117 = vcombine.low %v62, %v63
    %v118 = vcombine.low %v64, %v65
    %v120 = vunpack.c.l.s4 1983009808
    %v121 = vunpack.c.0.s8 %v120
    %v122 = vlaneseq
    %v123 = vshrl.u32 %v122, 7
    %v124 = vsub.s32 %v121, %v123
    %v125 = vrot.slane %v117, %v124
    %v127 = vunpack.c.l.s4 1983009808
    %v128 = vunpack.c.0.s8 %v127
    %v129 = vlaneseq
    %v130 = vshrl.u32 %v129, 7
    %v131 = vsub.s32 %v128, %v130
    %v132 = vrot.slane %v118, %v131
    %v133 = vcombine.low %v125, %v132
    %v134 = vcombine.low %v66, %v67
    %v135 = vcombine.low %v68, %v69
    %v137 = vunpack.c.l.s4 1983009808
    %v138 = vunpack.c.0.s8 %v137
    %v139 = vlaneseq
    %v140 = vshrl.u32 %v139, 7
    %v141 = vsub.s32 %v138, %v140
    %v142 = vrot.slane %v134, %v141
    %v144 = vunpack.c.l.s4 1983009808
    %v145 = vunpack.c.0.s8 %v144
    %v146 = vlaneseq
    %v147 = vshrl.u32 %v146, 7
    %v148 = vsub.s32 %v145, %v147
    %v149 = vrot.slane %v135, %v148
    %v150 = vcombine.low %v142, %v149
    %v151 = vcombine.low %v70, %v71
    %v152 = vcombine.low %v72, %v73
    %v154 = vunpack.c.l.s4 1983009808
    %v155 = vunpack.c.0.s8 %v154
    %v156 = vlaneseq
    %v157 = vshrl.u32 %v156, 7
    %v158 = vsub.s32 %v155, %v157
    %v159 = vrot.slane %v151, %v158
    %v161 = vunpack.c.l.s4 1983009808
    %v162 = vunpack.c.0.s8 %v161
    %v163 = vlaneseq
    %v164 = vshrl.u32 %v163, 7
    %v165 = vsub.s32 %v162, %v164
    %v166 = vrot.slane %v152, %v165
    %v167 = vcombine.low %v159, %v166
    %v168 = vcombine.low %v74, %v75
    %v169 = vcombine.low %v76, %v77
    %v171 = vunpack.c.l.s4 1983009808
    %v172 = vunpack.c.0.s8 %v171
    %v173 = vlaneseq
    %v174 = vshrl.u32 %v173, 7
    %v175 = vsub.s32 %v172, %v174
    %v176 = vrot.slane %v168, %v175
    %v178 = vunpack.c.l.s4 1983009808
    %v179 = vunpack.c.0.s8 %v178
    %v180 = vlaneseq
    %v181 = vshrl.u32 %v180, 7
    %v182 = vsub.s32 %v179, %v181
    %v183 = vrot.slane %v169, %v182
    %v184 = vcombine.low %v176, %v183
    %189 = vmatprep.subr.mxu0 0.0
    %190 = vmatpush1.msra.mxu0 %v93
    %191 = vmatprep.subr.mxu0 0.0
    %192 = vmatpush1.msra.mxu0 %v92
    %193 = vmatprep.subr.mxu0 0.0
    %194 = vmatpush1.msra.mxu0 %v91
    %195 = vmatprep.subr.mxu0 0.0
    %196 = vmatpush1.msra.mxu0 %v90
    %197 = vmatprep.subr.mxu0 0.0
    %198 = vmatpush1.msra.mxu0 %v89
    %199 = vmatprep.subr.mxu0 0.0
    %200 = vmatpush1.msra.mxu0 %v88
    %201 = vmatprep.subr.mxu0 0.0
    %202 = vmatpush1.msra.mxu0 %v87
    %203 = vmatprep.subr.mxu0 0.0
    %204 = vmatpush1.msra.mxu0 %v86
    %205 = vmatprep.subr.mxu0 0.0
    %206 = vmatpush1.msra.mxu0 %v85
    %207 = vmatprep.subr.mxu0 0.0
    %208 = vmatpush1.msra.mxu0 %v84
    %209 = vmatprep.subr.mxu0 0.0
    %210 = vmatpush1.msra.mxu0 %v83
    %211 = vmatprep.subr.mxu0 0.0
    %212 = vmatpush1.msra.mxu0 %v82
    %213 = vmatprep.subr.mxu0 0.0
    %214 = vmatpush1.msra.mxu0 %v81
    %215 = vmatprep.subr.mxu0 0.0
    %216 = vmatpush1.msra.mxu0 %v80
    %217 = vmatprep.subr.mxu0 0.0
    %218 = vmatpush1.msra.mxu0 %v79
    %219 = vmatprep.subr.mxu0 0.0
    %220 = vmatpush1.msra.mxu0 %v78
    %221 = vmatprep.subr.mxu0 0.0
    %222 = vmatpush2.msra.mxu0 0.0
    %223 = vmatprep.subr.mxu0 0.0
    %224 = vmatpush2.msra.mxu0 0.0
    %225 = vmatprep.subr.mxu0 0.0
    %226 = vmatpush2.msra.mxu0 0.0
    %227 = vmatprep.subr.mxu0 0.0
    %228 = vmatpush2.msra.mxu0 0.0
    %229 = vmatprep.subr.mxu0 0.0
    %230 = vmatpush2.msra.mxu0 0.0
    %231 = vmatprep.subr.mxu0 0.0
    %232 = vmatpush2.msra.mxu0 0.0
    %233 = vmatprep.subr.mxu0 0.0
    %234 = vmatpush2.msra.mxu0 0.0
    %235 = vmatprep.subr.mxu0 0.0
    %236 = vmatpush2.msra.mxu0 0.0
    %237 = vmatprep.subr.mxu0 0.0
    %238 = vmatpush2.msra.mxu0 0.0
    %239 = vmatprep.subr.mxu0 0.0
    %240 = vmatpush2.msra.mxu0 0.0
    %241 = vmatprep.subr.mxu0 0.0
    %242 = vmatpush2.msra.mxu0 0.0
    %243 = vmatprep.subr.mxu0 0.0
    %244 = vmatpush2.msra.mxu0 0.0
    %245 = vmatprep.subr.mxu0 0.0
    %246 = vmatpush2.msra.mxu0 0.0
    %247 = vmatprep.subr.mxu0 0.0
    %248 = vmatpush2.msra.mxu0 0.0
    %249 = vmatprep.subr.mxu0 0.0
    %250 = vmatpush2.msra.mxu0 0.0
    %251 = vmatprep.subr.mxu0 0.0
    %252 = vmatpush2.msra.mxu0 0.0
    %253 = vmatprep.mubr.f32.mxu0 0.0
    %254 = vmatmul.mubr.f32.gmra.mxu0 %v133
    %v255 = vpop.f32.mrf.mxu0
    %v256 = vadd.f32 %v99, %v255
    %v257 = vpop.f32.mrf.mxu0
    %258 = vmatprep.mubr.f32.mxu0 0.0
    %259 = vmatmul.mubr.f32.gmra.mxu0 %v150
    %v260 = vpop.f32.mrf.mxu0
    %v261 = vadd.f32 %v99, %v260
    %v262 = vpop.f32.mrf.mxu0
    %263 = vmatprep.mubr.f32.mxu0 0.0
    %264 = vmatmul.mubr.f32.gmra.mxu0 %v167
    %v265 = vpop.f32.mrf.mxu0
    %v266 = vadd.f32 %v99, %v265
    %v267 = vpop.f32.mrf.mxu0
    %268 = vmatprep.mubr.f32.mxu0 0.0
    %269 = vmatmul.mubr.f32.gmra.mxu0 %v184
    %v270 = vpop.f32.mrf.mxu0
    %v271 = vadd.f32 %v99, %v270
    %v272 = vpop.f32.mrf.mxu0
    %273 = vdwg.mxu0
    %v274 = vmax.f32 %v256, 0.0
    %v275 = vmax.f32 %v261, 0.0
    %v276 = vmax.f32 %v266, 0.0
    %v277 = vmax.f32 %v271, 0.0
    %v282 = vcombine.high %v274, %v274
    %v284 = vunpack.c.l.s4 1983009808
    %v285 = vunpack.c.0.s8 %v284
    %v286 = vlaneseq
    %v287 = vshrl.u32 %v286, 7
    %v288 = vsub.s32 %v285, %v287
    %v289 = vrot.slane %v274, %v288
    %v291 = vunpack.c.l.s4 1983009808
    %v292 = vunpack.c.0.s8 %v291
    %v293 = vlaneseq
    %v294 = vshrl.u32 %v293, 7
    %v295 = vsub.s32 %v292, %v294
    %v296 = vrot.slane %v282, %v295
    %v297 = vcombine.high %v289, %v289
    %v298 = vcombine.high %v296, %v296
    %v299 = vcombine.high %v275, %v275
    %v301 = vunpack.c.l.s4 1983009808
    %v302 = vunpack.c.0.s8 %v301
    %v303 = vlaneseq
    %v304 = vshrl.u32 %v303, 7
    %v305 = vsub.s32 %v302, %v304
    %v306 = vrot.slane %v275, %v305
    %v308 = vunpack.c.l.s4 1983009808
    %v309 = vunpack.c.0.s8 %v308
    %v310 = vlaneseq
    %v311 = vshrl.u32 %v310, 7
    %v312 = vsub.s32 %v309, %v311
    %v313 = vrot.slane %v299, %v312
    %v314 = vcombine.high %v306, %v306
    %v315 = vcombine.high %v313, %v313
    %v316 = vcombine.high %v276, %v276
    %v318 = vunpack.c.l.s4 1983009808
    %v319 = vunpack.c.0.s8 %v318
    %v320 = vlaneseq
    %v321 = vshrl.u32 %v320, 7
    %v322 = vsub.s32 %v319, %v321
    %v323 = vrot.slane %v276, %v322
    %v325 = vunpack.c.l.s4 1983009808
    %v326 = vunpack.c.0.s8 %v325
    %v327 = vlaneseq
    %v328 = vshrl.u32 %v327, 7
    %v329 = vsub.s32 %v326, %v328
    %v330 = vrot.slane %v316, %v329
    %v331 = vcombine.high %v323, %v323
    %v332 = vcombine.high %v330, %v330
    %v333 = vcombine.high %v277, %v277
    %v335 = vunpack.c.l.s4 1983009808
    %v336 = vunpack.c.0.s8 %v335
    %v337 = vlaneseq
    %v338 = vshrl.u32 %v337, 7
    %v339 = vsub.s32 %v336, %v338
    %v340 = vrot.slane %v277, %v339
    %v342 = vunpack.c.l.s4 1983009808
    %v343 = vunpack.c.0.s8 %v342
    %v344 = vlaneseq
    %v345 = vshrl.u32 %v344, 7
    %v346 = vsub.s32 %v343, %v345
    %v347 = vrot.slane %v333, %v346
    %v348 = vcombine.high %v340, %v340
    %v349 = vcombine.high %v347, %v347
    %v366 = vmax.f32 %v289, %v297
    %v367 = vmax.f32 %v296, %v298
    %v368 = vmax.f32 %v306, %v314
    %v369 = vmax.f32 %v313, %v315
    %v370 = vmax.f32 %v323, %v331
    %v371 = vmax.f32 %v330, %v332
    %v372 = vmax.f32 %v340, %v348
    %v373 = vmax.f32 %v347, %v349
    %v374 = vld [vmem:[#allocation7] sm:$0xff]
    %v375 = vld [vmem:[#allocation7 + $0x8] sm:$0xff]
    %v376 = vld [vmem:[#allocation7 + $0x10] sm:$0xff]
    %v377 = vld [vmem:[#allocation7 + $0x18] sm:$0xff]
    %v378 = vld [vmem:[#allocation7 + $0x20] sm:$0xff]
    %v379 = vld [vmem:[#allocation7 + $0x28] sm:$0xff]
    %v380 = vld [vmem:[#allocation7 + $0x30] sm:$0xff]
    %v381 = vld [vmem:[#allocation7 + $0x38] sm:$0xff]
    %v382 = vld [vmem:[#allocation7 + $0x40] sm:$0xff]
    %v383 = vld [vmem:[#allocation7 + $0x48] sm:$0xff]
    %v384 = vld [vmem:[#allocation7 + $0x50] sm:$0xff]
    %v385 = vld [vmem:[#allocation7 + $0x58] sm:$0xff]
    %v386 = vld [vmem:[#allocation7 + $0x60] sm:$0xff]
    %v387 = vld [vmem:[#allocation7 + $0x68] sm:$0xff]
    %v388 = vld [vmem:[#allocation7 + $0x70] sm:$0xff]
    %v389 = vld [vmem:[#allocation7 + $0x78] sm:$0xff]
    %v390 = vld [vmem:[%s4] sm:$0x1]
    %v392 = vlaneseq
    %v393 = vshrl.u32 %v392, 7
    %v394 = vsub.s32 0, %v393
    %v395 = vrot.slane %v390, %v394
    %v405 = vcombine.low %v366, %v367
    %v406 = vcombine.low %v368, %v369
    %v408 = vunpack.c.l.s4 1983009808
    %v409 = vunpack.c.0.s8 %v408
    %v410 = vlaneseq
    %v411 = vshrl.u32 %v410, 7
    %v412 = vsub.s32 %v409, %v411
    %v413 = vrot.slane %v405, %v412
    %v415 = vunpack.c.l.s4 1983009808
    %v416 = vunpack.c.0.s8 %v415
    %v417 = vlaneseq
    %v418 = vshrl.u32 %v417, 7
    %v419 = vsub.s32 %v416, %v418
    %v420 = vrot.slane %v406, %v419
    %v421 = vcombine.low %v413, %v420
    %v422 = vcombine.low %v370, %v371
    %v423 = vcombine.low %v372, %v373
    %v425 = vunpack.c.l.s4 1983009808
    %v426 = vunpack.c.0.s8 %v425
    %v427 = vlaneseq
    %v428 = vshrl.u32 %v427, 7
    %v429 = vsub.s32 %v426, %v428
    %v430 = vrot.slane %v422, %v429
    %v432 = vunpack.c.l.s4 1983009808
    %v433 = vunpack.c.0.s8 %v432
    %v434 = vlaneseq
    %v435 = vshrl.u32 %v434, 7
    %v436 = vsub.s32 %v433, %v435
    %v437 = vrot.slane %v423, %v436
    %v438 = vcombine.low %v430, %v437
    %441 = vmatprep.subr.mxu0 0.0
    %442 = vmatpush1.msra.mxu0 %v389
    %443 = vmatprep.subr.mxu0 0.0
    %444 = vmatpush1.msra.mxu0 %v388
    %445 = vmatprep.subr.mxu0 0.0
    %446 = vmatpush1.msra.mxu0 %v387
    %447 = vmatprep.subr.mxu0 0.0
    %448 = vmatpush1.msra.mxu0 %v386
    %449 = vmatprep.subr.mxu0 0.0
    %450 = vmatpush1.msra.mxu0 %v385
    %451 = vmatprep.subr.mxu0 0.0
    %452 = vmatpush1.msra.mxu0 %v384
    %453 = vmatprep.subr.mxu0 0.0
    %454 = vmatpush1.msra.mxu0 %v383
    %455 = vmatprep.subr.mxu0 0.0
    %456 = vmatpush1.msra.mxu0 %v382
    %457 = vmatprep.subr.mxu0 0.0
    %458 = vmatpush1.msra.mxu0 %v381
    %459 = vmatprep.subr.mxu0 0.0
    %460 = vmatpush1.msra.mxu0 %v380
    %461 = vmatprep.subr.mxu0 0.0
    %462 = vmatpush1.msra.mxu0 %v379
    %463 = vmatprep.subr.mxu0 0.0
    %464 = vmatpush1.msra.mxu0 %v378
    %465 = vmatprep.subr.mxu0 0.0
    %466 = vmatpush1.msra.mxu0 %v377
    %467 = vmatprep.subr.mxu0 0.0
    %468 = vmatpush1.msra.mxu0 %v376
    %469 = vmatprep.subr.mxu0 0.0
    %470 = vmatpush1.msra.mxu0 %v375
    %471 = vmatprep.subr.mxu0 0.0
    %472 = vmatpush1.msra.mxu0 %v374
    %473 = vmatprep.subr.mxu0 0.0
    %474 = vmatpush2.msra.mxu0 0.0
    %475 = vmatprep.subr.mxu0 0.0
    %476 = vmatpush2.msra.mxu0 0.0
    %477 = vmatprep.subr.mxu0 0.0
    %478 = vmatpush2.msra.mxu0 0.0
    %479 = vmatprep.subr.mxu0 0.0
    %480 = vmatpush2.msra.mxu0 0.0
    %481 = vmatprep.subr.mxu0 0.0
    %482 = vmatpush2.msra.mxu0 0.0
    %483 = vmatprep.subr.mxu0 0.0
    %484 = vmatpush2.msra.mxu0 0.0
    %485 = vmatprep.subr.mxu0 0.0
    %486 = vmatpush2.msra.mxu0 0.0
    %487 = vmatprep.subr.mxu0 0.0
    %488 = vmatpush2.msra.mxu0 0.0
    %489 = vmatprep.subr.mxu0 0.0
    %490 = vmatpush2.msra.mxu0 0.0
    %491 = vmatprep.subr.mxu0 0.0
    %492 = vmatpush2.msra.mxu0 0.0
    %493 = vmatprep.subr.mxu0 0.0
    %494 = vmatpush2.msra.mxu0 0.0
    %495 = vmatprep.subr.mxu0 0.0
    %496 = vmatpush2.msra.mxu0 0.0
    %497 = vmatprep.subr.mxu0 0.0
    %498 = vmatpush2.msra.mxu0 0.0
    %499 = vmatprep.subr.mxu0 0.0
    %500 = vmatpush2.msra.mxu0 0.0
    %501 = vmatprep.subr.mxu0 0.0
    %502 = vmatpush2.msra.mxu0 0.0
    %503 = vmatprep.subr.mxu0 0.0
    %504 = vmatpush2.msra.mxu0 0.0
    %505 = vmatprep.mubr.f32.mxu0 0.0
    %506 = vmatmul.mubr.f32.gmra.mxu0 %v421
    %v507 = vpop.f32.mrf.mxu0
    %v508 = vadd.f32 %v395, %v507
    %v509 = vpop.f32.mrf.mxu0
    %510 = vmatprep.mubr.f32.mxu0 0.0
    %511 = vmatmul.mubr.f32.gmra.mxu0 %v438
    %v512 = vpop.f32.mrf.mxu0
    %v513 = vadd.f32 %v395, %v512
    %v514 = vpop.f32.mrf.mxu0
    %515 = vdwg.mxu0
    %v518 = vcombine.high %v508, %v508
    %v520 = vunpack.c.l.s4 1983009808
    %v521 = vunpack.c.0.s8 %v520
    %v522 = vlaneseq
    %v523 = vshrl.u32 %v522, 7
    %v524 = vsub.s32 %v521, %v523
    %v525 = vrot.slane %v508, %v524
    %v527 = vunpack.c.l.s4 1983009808
    %v528 = vunpack.c.0.s8 %v527
    %v529 = vlaneseq
    %v530 = vshrl.u32 %v529, 7
    %v531 = vsub.s32 %v528, %v530
    %v532 = vrot.slane %v518, %v531
    %v533 = vcombine.high %v525, %v525
    %v534 = vcombine.high %v532, %v532
    %v535 = vcombine.high %v513, %v513
    %v537 = vunpack.c.l.s4 1983009808
    %v538 = vunpack.c.0.s8 %v537
    %v539 = vlaneseq
    %v540 = vshrl.u32 %v539, 7
    %v541 = vsub.s32 %v538, %v540
    %v542 = vrot.slane %v513, %v541
    %v544 = vunpack.c.l.s4 1983009808
    %v545 = vunpack.c.0.s8 %v544
    %v546 = vlaneseq
    %v547 = vshrl.u32 %v546, 7
    %v548 = vsub.s32 %v545, %v547
    %v549 = vrot.slane %v535, %v548
    %v550 = vcombine.high %v542, %v542
    %v551 = vcombine.high %v549, %v549
    %560 = vst [vmem:[#allocation8] sm:$0x3] %v525
    %561 = vst [vmem:[#allocation8 + $0x2] sm:$0x3] %v533
    %562 = vst [vmem:[#allocation8 + $0x4] sm:$0x3] %v532
    %563 = vst [vmem:[#allocation8 + $0x6] sm:$0x3] %v534
    %564 = vst [vmem:[#allocation8 + $0x8] sm:$0x3] %v542
    %565 = vst [vmem:[#allocation8 + $0xa] sm:$0x3] %v550
    %566 = vst [vmem:[#allocation8 + $0xc] sm:$0x3] %v549
    %567 = vst [vmem:[#allocation8 + $0xe] sm:$0x3] %v551
    // Predicated region
    $region34: #{tpu_custom_call.1} parent=1 // pred_check
      _
    $region35: #{tpu_custom_call.1} parent=1 // pred_check_branch
      %569 = sbr.rel (0) target = $region37
    $region36: #{tpu_custom_call.1} parent=1 // pred_region
      %s571 = ssub.s32 256, 256
      %572 = vsyncadd [#allocation4], %s571
      %s573 = sshll.u32 [#allocation8], 4
      %s574 = int_to_ptr.vmem [resolvable:$true] %s573
      %579 = dma.vmem_to_hbm [thread:$0]  %s574, 256, %s5, [#allocation4], 32, 32, 2
    $region37: #{tpu_custom_call.1} parent=1 // pred_fallthru
      _
    // Predicated region
    $region38: #{tpu_custom_call.1} parent=1 // pred_check
      _
    $region39: #{tpu_custom_call.1} parent=1 // pred_check_branch
      %581 = sbr.rel (0) target = $region41
    $region40: #{tpu_custom_call.1} parent=1 // pred_region
      %582 = dma.done [#allocation4], 256
    $region41: #{tpu_custom_call.1} parent=1 // pred_fallthru
      _
    %583 = vsyncpa [#allocation3], 1
    %584 = vsyncpa [#allocation6], 1
    %585 = vsyncpa [#allocation4], 1

</llo_original>
